<compile_context>
chip_gen: v5e
topology: v5e:2x2
jax: 0.10.0
libtpu: 0.0.40
codegen_flags: <defaults>
</compile_context>

<pallas_src>
import functools
from typing import NamedTuple

import jax
import jax.numpy as jnp
from jax.experimental import pallas as pl
from jax.experimental.pallas import tpu as pltpu

_LANE = 128
_SUBLANE = 8


def _round_up(n: int, m: int) -> int:
    return ((n + m - 1) // m) * m


def _vmem_capacity_bytes() -> int:
    """Physical VMEM per TensorCore; conservative (v7x) fallback if unknown."""
    try:
        return int(pltpu.get_tpu_info().vmem_capacity_bytes)
    except Exception:
        return 64 * 1024 * 1024


def _resident_spec(shape, single_buffer: bool):
    """Full-array block with a constant index map (fetched once, stays resident).

    Params never change across the batch grid, so single-buffer them: Pallas
    otherwise allocates 2 buffers per input even for a constant block index,
    and resident params are the dominant VMEM consumer here.
    """
    if single_buffer and hasattr(pl, "Buffered"):
        try:
            return pl.BlockSpec(shape, lambda i: (0, 0), pipeline_mode=pl.Buffered(1))
        except TypeError:
            pass
    return pl.BlockSpec(shape, lambda i: (0, 0))


class _Plan(NamedTuple):
    block_b: int          # batch tile (multiple of 8)
    sub_m: int            # in-kernel M sub-tile (divides block_b)
    b_pad: int            # batch padded up to a multiple of block_b
    dims_pad: tuple       # 128-padded layer widths, len = num_layers + 1
    out_dim: int          # true (unpadded) output width
    vmem_limit: int       # scoped-VMEM limit to request
    use_bf16: bool        # bf16 MXU operands
    single_buffer: bool   # single-buffer resident params


def _make_kernel(num_layers: int, num_sub: int, sub_m: int, inter_dtype):
    """Kernel body. Ref order: x_ref, w_0, b_0, ..., w_{L-1}, b_{L-1}, out_ref."""

    def kernel(*refs):
        x_ref = refs[0]
        out_ref = refs[-1]
        params = refs[1:-1]

        for j in range(num_sub):                      # static sub-tiles over rows
            rows = pl.ds(j * sub_m, sub_m)
            h = x_ref[rows, :]
            if h.dtype != inter_dtype:
                h = h.astype(inter_dtype)
            for k in range(num_layers):
                w = params[2 * k][...]                # native/bf16 operand -> MXU
                b = params[2 * k + 1][...].astype(jnp.float32)
                acc = jnp.dot(h, w, preferred_element_type=jnp.float32) + b
                if k != num_layers - 1:
                    acc = acc * jax.nn.sigmoid(acc)   # SiLU in f32 (exp on EUP)
                    h = acc.astype(inter_dtype)
                else:
                    h = acc
            out_ref[rows, :] = h.astype(out_ref.dtype)

    return kernel


@functools.partial(jax.jit, static_argnums=(3,))
def _forward_impl(x, weights, biases, plan: _Plan):
    B, d_in = x.shape
    num_layers = len(weights)
    dims_pad = plan.dims_pad
    d_in_pad, out_pad = dims_pad[0], dims_pad[-1]

    inter_dtype = jnp.bfloat16 if plan.use_bf16 else x.dtype

    # Zero-pad batch and every layer width (numerically inert).
    x_p = x
    if plan.b_pad != B or d_in_pad != d_in:
        x_p = jnp.pad(x, ((0, plan.b_pad - B), (0, d_in_pad - d_in)))
    if plan.use_bf16 and x_p.dtype != jnp.bfloat16:
        x_p = x_p.astype(jnp.bfloat16)                # halves streamed-x DMA

    in_specs = [pl.BlockSpec((plan.block_b, d_in_pad), lambda i: (i, 0))]
    flat_params = []
    for k, (w, b) in enumerate(zip(weights, biases)):
        dk, dk1 = w.shape
        pk, pk1 = dims_pad[k], dims_pad[k + 1]
        if (pk, pk1) != (dk, dk1):
            w = jnp.pad(w, ((0, pk - dk), (0, pk1 - dk1)))
            b = jnp.pad(b, ((0, 0), (0, pk1 - dk1)))
        if plan.use_bf16 and w.dtype != jnp.bfloat16:
            w = w.astype(jnp.bfloat16)                # bf16-native MXU on v6e/v7x
        flat_params += [w, b]
        in_specs.append(_resident_spec((pk, pk1), plan.single_buffer))
        in_specs.append(_resident_spec((1, pk1), plan.single_buffer))

    out_spec = pl.BlockSpec((plan.block_b, out_pad), lambda i: (i, 0))

    grid = plan.b_pad // plan.block_b
    num_sub = plan.block_b // plan.sub_m
    kernel = _make_kernel(num_layers, num_sub, plan.sub_m, inter_dtype)

    # Advisory cost estimate for XLA's scheduler around the custom call.
    flops = 2 * plan.b_pad * sum(a * b2 for a, b2 in zip(dims_pad[:-1], dims_pad[1:]))
    transcendentals = plan.b_pad * sum(dims_pad[1:-1])
    bytes_accessed = (
        int(x_p.size) * jnp.dtype(x_p.dtype).itemsize
        + sum(int(p.size) * jnp.dtype(p.dtype).itemsize for p in flat_params)
        + plan.b_pad * out_pad * jnp.dtype(x.dtype).itemsize
    )

    out_padded = pl.pallas_call(
        kernel,
        out_shape=jax.ShapeDtypeStruct((plan.b_pad, out_pad), x.dtype),
        grid=(grid,),
        in_specs=in_specs,
        out_specs=out_spec,
        compiler_params=pltpu.CompilerParams(
            dimension_semantics=("parallel",),
            vmem_limit_bytes=plan.vmem_limit,
        ),
        cost_estimate=pl.CostEstimate(
            flops=flops,
            transcendentals=transcendentals,
            bytes_accessed=bytes_accessed,
        ),
    )(x_p, *flat_params)

    return out_padded[:B, : plan.out_dim]


def multilinear_forward(x, weights, biases, *, block_b=None, use_bf16_matmul=None):
    """x: (B, D_in); weights[k]: (d_k, d_{k+1}); biases[k]: (1, d_{k+1})."""
    B, d_in = x.shape
    num_layers = len(weights)
    assert num_layers == len(biases) and num_layers >= 1
    out_dim = int(weights[-1].shape[1])

    if use_bf16_matmul is None:
        use_bf16_matmul = bool(x.dtype == jnp.bfloat16)

    dims = [d_in] + [int(w.shape[1]) for w in weights]
    dims_pad = tuple(_round_up(d, _LANE) for d in dims)
    widest = max(dims_pad)

    act_itemsize = jnp.dtype(x.dtype).itemsize
    in_itemsize = 2 if use_bf16_matmul else act_itemsize
    param_itemsize = 2 if use_bf16_matmul else jnp.dtype(weights[0].dtype).itemsize
    # Resident params are single-buffered (see _resident_spec).
    param_bytes = sum(
        dims_pad[k] * dims_pad[k + 1] * param_itemsize
        + dims_pad[k + 1] * jnp.dtype(biases[k].dtype).itemsize
        for k in range(num_layers)
    )

    # Generation-aware scoped-VMEM ceiling: ~96 MiB on 128 MiB parts (v5e/v6e),
    # ~48 MiB on v7x's 64 MiB per TensorCore.
    vmem_cap = int(0.75 * _vmem_capacity_bytes())

    if block_b is None:
        block_b = min(512, _round_up(max(B, _SUBLANE), _SUBLANE))
        while block_b > _SUBLANE:
            stream = 2 * block_b * (dims_pad[0] * in_itemsize + dims_pad[-1] * act_itemsize)
            scratch = 2 * min(block_b, 256) * widest * 4   # live f32 h/acc sub-tile
            if stream + param_bytes + scratch <= vmem_cap:
                break
            block_b = max(_SUBLANE, _round_up(block_b // 2, _SUBLANE))
    else:
        block_b = _round_up(int(block_b), _SUBLANE)

    # In-kernel M sub-tiling: keep the widest f32 activation sub-tile within
    # ~half the 256 KiB vreg file (spill control; v5e has 1 vst slot/bundle).
    sub_target = max(_SUBLANE, (128 * 1024) // max(widest * 4, 1))
    sub_m = block_b
    for cand in range(block_b, _SUBLANE - 1, -_SUBLANE):
        if block_b % cand == 0 and cand <= sub_target:
            sub_m = cand
            break

    b_pad = _round_up(max(B, _SUBLANE), block_b)

    stream = 2 * block_b * (dims_pad[0] * in_itemsize + dims_pad[-1] * act_itemsize)
    scratch = 2 * sub_m * widest * 4
    needed = stream + param_bytes + scratch + (2 << 20)    # headroom
    vmem_limit = int(min(vmem_cap, max(needed, 16 << 20)))

    plan = _Plan(block_b=block_b, sub_m=sub_m, b_pad=b_pad, dims_pad=dims_pad,
                 out_dim=out_dim, vmem_limit=vmem_limit,
                 use_bf16=bool(use_bf16_matmul), single_buffer=True)
    try:
        return _forward_impl(x, tuple(weights), tuple(biases), plan)
    except Exception:
        # Fallback: this jax build may not support Buffered(1) on pallas_call
        # inputs; retrace with default double-buffered params.
        plan = plan._replace(single_buffer=False)
        return _forward_impl(x, tuple(weights), tuple(biases), plan)


def init_multilinear_params(key, input_dim, hidden_dims, output_dim, dtype=jnp.float32):
    """Deterministic init mirroring nn.Linear's default U(-1/sqrt(fan_in), ...)."""
    dims = [input_dim] + list(hidden_dims) + [output_dim]
    weights, biases = [], []
    for d_in, d_out in zip(dims[:-1], dims[1:]):
        key, kw, kb = jax.random.split(key, 3)
        bound = 1.0 / jnp.sqrt(d_in)
        # Stored already transposed to (in, out) for y = x @ W + b.
        w = jax.random.uniform(kw, (d_in, d_out), dtype, -bound, bound)
        b = jax.random.uniform(kb, (1, d_out), dtype, -bound, bound)
        weights.append(w)
        biases.append(b)
    return weights, biases


def multilinear_reference(x, weights, biases):
    h = x.astype(jnp.float32)
    n = len(weights)
    for k, (w, b) in enumerate(zip(weights, biases)):
        h = h @ w.astype(jnp.float32) + b.astype(jnp.float32)
        if k != n - 1:
            h = h * jax.nn.sigmoid(h)
    return h.astype(x.dtype)


if __name__ == "__main__":
    key = jax.random.PRNGKey(0)
    k_x, k_p, k_x2 = jax.random.split(key, 3)

    # Shapes consistent with MultiLinear(input_dim=32, hidden_dims=[64, 32], output_dim=16)
    batch = 16
    input_dim, hidden_dims, output_dim = 32, [64, 32], 16

    x = jax.random.normal(k_x, (batch, input_dim), jnp.float32)
    weights, biases = init_multilinear_params(k_p, input_dim, hidden_dims, output_dim)

    out = jax.block_until_ready(multilinear_forward(x, weights, biases))
    ref = multilinear_reference(x, weights, biases)
    assert out.shape == (batch, output_dim)
    assert jnp.allclose(out, ref, atol=1e-5, rtol=1e-5), "mismatch vs reference"

    # Awkward (non-multiple-of-8) batch exercises the batch-padding path.
    x2 = jax.random.normal(k_x2, (10, input_dim), jnp.float32)
    out2 = jax.block_until_ready(multilinear_forward(x2, weights, biases))
    ref2 = multilinear_reference(x2, weights, biases)
    assert out2.shape == (10, output_dim)
    assert jnp.allclose(out2, ref2, atol=1e-5, rtol=1e-5), "mismatch vs reference (padded batch)"

    print("KERNEL_OK")
</pallas_src>

<mosaic_0001>
module attributes {stable_mosaic.version = 11 : i64} {
  func.func @kernel(%arg0: i32, %arg1: memref<16x128xf32, #tpu.memory_space<vmem>>, %arg2: memref<128x128xf32, #tpu.memory_space<vmem>>, %arg3: memref<1x128xf32, #tpu.memory_space<vmem>>, %arg4: memref<128x128xf32, #tpu.memory_space<vmem>>, %arg5: memref<1x128xf32, #tpu.memory_space<vmem>>, %arg6: memref<128x128xf32, #tpu.memory_space<vmem>>, %arg7: memref<1x128xf32, #tpu.memory_space<vmem>>, %arg8: memref<16x128xf32, #tpu.memory_space<vmem>>) attributes {dimension_semantics = [#tpu.dimension_semantics<parallel>], iteration_bounds = array<i64: 1>, scalar_prefetch = 0 : i64, scratch_operands = 0 : i64, tpu.core_type = #tpu.core_type<tc>, window_params = [{transform_indices = @transform_0, window_bounds = array<i64: 16, 128>}, {pipeline_mode = #tpu.pipeline_mode<synchronous>, transform_indices = @transform_1, window_bounds = array<i64: 128, 128>}, {pipeline_mode = #tpu.pipeline_mode<synchronous>, transform_indices = @transform_2, window_bounds = array<i64: 1, 128>}, {pipeline_mode = #tpu.pipeline_mode<synchronous>, transform_indices = @transform_3, window_bounds = array<i64: 128, 128>}, {pipeline_mode = #tpu.pipeline_mode<synchronous>, transform_indices = @transform_4, window_bounds = array<i64: 1, 128>}, {pipeline_mode = #tpu.pipeline_mode<synchronous>, transform_indices = @transform_5, window_bounds = array<i64: 128, 128>}, {pipeline_mode = #tpu.pipeline_mode<synchronous>, transform_indices = @transform_6, window_bounds = array<i64: 1, 128>}, {transform_indices = @transform_7, window_bounds = array<i64: 16, 128>}]} {
    %c0 = arith.constant 0 : index
    %c0_0 = arith.constant 0 : index
    %0 = vector.load %arg1[%c0, %c0_0] : memref<16x128xf32, #tpu.memory_space<vmem>>, vector<16x128xf32>
    %c0_1 = arith.constant 0 : index
    %c0_2 = arith.constant 0 : index
    %1 = vector.load %arg2[%c0_1, %c0_2] : memref<128x128xf32, #tpu.memory_space<vmem>>, vector<128x128xf32>
    %c0_3 = arith.constant 0 : index
    %c0_4 = arith.constant 0 : index
    %2 = vector.load %arg3[%c0_3, %c0_4] : memref<1x128xf32, #tpu.memory_space<vmem>>, vector<1x128xf32>
    %cst = arith.constant dense<0.000000e+00> : vector<16x128xf32>
    %3 = tpu.matmul %0, %1, %cst {dimension_numbers = #tpu.dot_dimension_numbers<[1], [0], [0], [1], [0, 0, 1, 1], [], []>} : vector<16x128xf32>, vector<128x128xf32>, vector<16x128xf32> -> vector<16x128xf32>
    %4 = vector.broadcast %2 : vector<1x128xf32> to vector<16x128xf32>
    %5 = arith.addf %3, %4 : vector<16x128xf32>
    %6 = arith.negf %5 : vector<16x128xf32>
    %7 = math.exp %6 : vector<16x128xf32>
    %cst_5 = arith.constant 1.000000e+00 : f32
    %8 = vector.broadcast %cst_5 : f32 to vector<16x128xf32>
    %9 = arith.addf %8, %7 : vector<16x128xf32>
    %10 = arith.divf %8, %9 : vector<16x128xf32>
    %11 = arith.mulf %5, %10 : vector<16x128xf32>
    %c0_6 = arith.constant 0 : index
    %c0_7 = arith.constant 0 : index
    %12 = vector.load %arg4[%c0_6, %c0_7] : memref<128x128xf32, #tpu.memory_space<vmem>>, vector<128x128xf32>
    %c0_8 = arith.constant 0 : index
    %c0_9 = arith.constant 0 : index
    %13 = vector.load %arg5[%c0_8, %c0_9] : memref<1x128xf32, #tpu.memory_space<vmem>>, vector<1x128xf32>
    %cst_10 = arith.constant dense<0.000000e+00> : vector<16x128xf32>
    %14 = tpu.matmul %11, %12, %cst_10 {dimension_numbers = #tpu.dot_dimension_numbers<[1], [0], [0], [1], [0, 0, 1, 1], [], []>} : vector<16x128xf32>, vector<128x128xf32>, vector<16x128xf32> -> vector<16x128xf32>
    %15 = vector.broadcast %13 : vector<1x128xf32> to vector<16x128xf32>
    %16 = arith.addf %14, %15 : vector<16x128xf32>
    %17 = arith.negf %16 : vector<16x128xf32>
    %18 = math.exp %17 : vector<16x128xf32>
    %cst_11 = arith.constant 1.000000e+00 : f32
    %19 = vector.broadcast %cst_11 : f32 to vector<16x128xf32>
    %20 = arith.addf %19, %18 : vector<16x128xf32>
    %21 = arith.divf %19, %20 : vector<16x128xf32>
    %22 = arith.mulf %16, %21 : vector<16x128xf32>
    %c0_12 = arith.constant 0 : index
    %c0_13 = arith.constant 0 : index
    %23 = vector.load %arg6[%c0_12, %c0_13] : memref<128x128xf32, #tpu.memory_space<vmem>>, vector<128x128xf32>
    %c0_14 = arith.constant 0 : index
    %c0_15 = arith.constant 0 : index
    %24 = vector.load %arg7[%c0_14, %c0_15] : memref<1x128xf32, #tpu.memory_space<vmem>>, vector<1x128xf32>
    %cst_16 = arith.constant dense<0.000000e+00> : vector<16x128xf32>
    %25 = tpu.matmul %22, %23, %cst_16 {dimension_numbers = #tpu.dot_dimension_numbers<[1], [0], [0], [1], [0, 0, 1, 1], [], []>} : vector<16x128xf32>, vector<128x128xf32>, vector<16x128xf32> -> vector<16x128xf32>
    %26 = vector.broadcast %24 : vector<1x128xf32> to vector<16x128xf32>
    %27 = arith.addf %25, %26 : vector<16x128xf32>
    %c0_17 = arith.constant 0 : index
    %c0_18 = arith.constant 0 : index
    %28 = vector.load %arg8[%c0_17, %c0_18] : memref<16x128xf32, #tpu.memory_space<vmem>>, vector<16x128xf32>
    tpu.vector_store %arg8[%c0_17, %c0_18], %27 {strides = array<i32>} : memref<16x128xf32, #tpu.memory_space<vmem>>, vector<16x128xf32>,
    return
  }
  func.func @transform_0(%arg0: i32) -> (i32, i32) {
    %c0_i32 = arith.constant 0 : i32
    %c0_i32_0 = arith.constant 0 : i32
    return %arg0, %c0_i32 : i32, i32
  }
  func.func @transform_1(%arg0: i32) -> (i32, i32) {
    %c0_i32 = arith.constant 0 : i32
    %c0_i32_0 = arith.constant 0 : i32
    %c0_i32_1 = arith.constant 0 : i32
    return %c0_i32, %c0_i32_0 : i32, i32
  }
  func.func @transform_2(%arg0: i32) -> (i32, i32) {
    %c0_i32 = arith.constant 0 : i32
    %c0_i32_0 = arith.constant 0 : i32
    %c0_i32_1 = arith.constant 0 : i32
    return %c0_i32, %c0_i32_0 : i32, i32
  }
  func.func @transform_3(%arg0: i32) -> (i32, i32) {
    %c0_i32 = arith.constant 0 : i32
    %c0_i32_0 = arith.constant 0 : i32
    %c0_i32_1 = arith.constant 0 : i32
    return %c0_i32, %c0_i32_0 : i32, i32
  }
  func.func @transform_4(%arg0: i32) -> (i32, i32) {
    %c0_i32 = arith.constant 0 : i32
    %c0_i32_0 = arith.constant 0 : i32
    %c0_i32_1 = arith.constant 0 : i32
    return %c0_i32, %c0_i32_0 : i32, i32
  }
  func.func @transform_5(%arg0: i32) -> (i32, i32) {
    %c0_i32 = arith.constant 0 : i32
    %c0_i32_0 = arith.constant 0 : i32
    %c0_i32_1 = arith.constant 0 : i32
    return %c0_i32, %c0_i32_0 : i32, i32
  }
  func.func @transform_6(%arg0: i32) -> (i32, i32) {
    %c0_i32 = arith.constant 0 : i32
    %c0_i32_0 = arith.constant 0 : i32
    %c0_i32_1 = arith.constant 0 : i32
    return %c0_i32, %c0_i32_0 : i32, i32
  }
  func.func @transform_7(%arg0: i32) -> (i32, i32) {
    %c0_i32 = arith.constant 0 : i32
    %c0_i32_0 = arith.constant 0 : i32
    return %arg0, %c0_i32 : i32, i32
  }
}

module attributes {stable_mosaic.version = 11 : i64} {
  func.func @kernel(%arg0: i32, %arg1: memref<16x128xf32, #tpu.memory_space<vmem>>, %arg2: memref<128x128xf32, #tpu.memory_space<vmem>>, %arg3: memref<1x128xf32, #tpu.memory_space<vmem>>, %arg4: memref<128x128xf32, #tpu.memory_space<vmem>>, %arg5: memref<1x128xf32, #tpu.memory_space<vmem>>, %arg6: memref<128x128xf32, #tpu.memory_space<vmem>>, %arg7: memref<1x128xf32, #tpu.memory_space<vmem>>, %arg8: memref<16x128xf32, #tpu.memory_space<vmem>>) attributes {dimension_semantics = [#tpu.dimension_semantics<parallel>], iteration_bounds = array<i64: 1>, scalar_prefetch = 0 : i64, scratch_operands = 0 : i64, tpu.core_type = #tpu.core_type<tc>, window_params = [{transform_indices = @transform_0, window_bounds = array<i64: 16, 128>}, {pipeline_mode = #tpu.pipeline_mode<synchronous>, transform_indices = @transform_1, window_bounds = array<i64: 128, 128>}, {pipeline_mode = #tpu.pipeline_mode<synchronous>, transform_indices = @transform_2, window_bounds = array<i64: 1, 128>}, {pipeline_mode = #tpu.pipeline_mode<synchronous>, transform_indices = @transform_3, window_bounds = array<i64: 128, 128>}, {pipeline_mode = #tpu.pipeline_mode<synchronous>, transform_indices = @transform_4, window_bounds = array<i64: 1, 128>}, {pipeline_mode = #tpu.pipeline_mode<synchronous>, transform_indices = @transform_5, window_bounds = array<i64: 128, 128>}, {pipeline_mode = #tpu.pipeline_mode<synchronous>, transform_indices = @transform_6, window_bounds = array<i64: 1, 128>}, {transform_indices = @transform_7, window_bounds = array<i64: 16, 128>}]} {
    %c0 = arith.constant 0 : index
    %c0_0 = arith.constant 0 : index
    %0 = vector.load %arg1[%c0, %c0_0] : memref<16x128xf32, #tpu.memory_space<vmem>>, vector<16x128xf32>
    %c0_1 = arith.constant 0 : index
    %c0_2 = arith.constant 0 : index
    %1 = vector.load %arg2[%c0_1, %c0_2] : memref<128x128xf32, #tpu.memory_space<vmem>>, vector<128x128xf32>
    %c0_3 = arith.constant 0 : index
    %c0_4 = arith.constant 0 : index
    %2 = vector.load %arg3[%c0_3, %c0_4] : memref<1x128xf32, #tpu.memory_space<vmem>>, vector<1x128xf32>
    %cst = arith.constant dense<0.000000e+00> : vector<16x128xf32>
    %3 = tpu.matmul %0, %1, %cst {dimension_numbers = #tpu.dot_dimension_numbers<[1], [0], [0], [1], [0, 0, 1, 1], [], []>} : vector<16x128xf32>, vector<128x128xf32>, vector<16x128xf32> -> vector<16x128xf32>
    %4 = vector.broadcast %2 : vector<1x128xf32> to vector<16x128xf32>
    %5 = arith.addf %3, %4 : vector<16x128xf32>
    %6 = arith.negf %5 : vector<16x128xf32>
    %7 = math.exp %6 : vector<16x128xf32>
    %cst_5 = arith.constant 1.000000e+00 : f32
    %8 = vector.broadcast %cst_5 : f32 to vector<16x128xf32>
    %9 = arith.addf %8, %7 : vector<16x128xf32>
    %10 = arith.divf %8, %9 : vector<16x128xf32>
    %11 = arith.mulf %5, %10 : vector<16x128xf32>
    %c0_6 = arith.constant 0 : index
    %c0_7 = arith.constant 0 : index
    %12 = vector.load %arg4[%c0_6, %c0_7] : memref<128x128xf32, #tpu.memory_space<vmem>>, vector<128x128xf32>
    %c0_8 = arith.constant 0 : index
    %c0_9 = arith.constant 0 : index
    %13 = vector.load %arg5[%c0_8, %c0_9] : memref<1x128xf32, #tpu.memory_space<vmem>>, vector<1x128xf32>
    %cst_10 = arith.constant dense<0.000000e+00> : vector<16x128xf32>
    %14 = tpu.matmul %11, %12, %cst_10 {dimension_numbers = #tpu.dot_dimension_numbers<[1], [0], [0], [1], [0, 0, 1, 1], [], []>} : vector<16x128xf32>, vector<128x128xf32>, vector<16x128xf32> -> vector<16x128xf32>
    %15 = vector.broadcast %13 : vector<1x128xf32> to vector<16x128xf32>
    %16 = arith.addf %14, %15 : vector<16x128xf32>
    %17 = arith.negf %16 : vector<16x128xf32>
    %18 = math.exp %17 : vector<16x128xf32>
    %cst_11 = arith.constant 1.000000e+00 : f32
    %19 = vector.broadcast %cst_11 : f32 to vector<16x128xf32>
    %20 = arith.addf %19, %18 : vector<16x128xf32>
    %21 = arith.divf %19, %20 : vector<16x128xf32>
    %22 = arith.mulf %16, %21 : vector<16x128xf32>
    %c0_12 = arith.constant 0 : index
    %c0_13 = arith.constant 0 : index
    %23 = vector.load %arg6[%c0_12, %c0_13] : memref<128x128xf32, #tpu.memory_space<vmem>>, vector<128x128xf32>
    %c0_14 = arith.constant 0 : index
    %c0_15 = arith.constant 0 : index
    %24 = vector.load %arg7[%c0_14, %c0_15] : memref<1x128xf32, #tpu.memory_space<vmem>>, vector<1x128xf32>
    %cst_16 = arith.constant dense<0.000000e+00> : vector<16x128xf32>
    %25 = tpu.matmul %22, %23, %cst_16 {dimension_numbers = #tpu.dot_dimension_numbers<[1], [0], [0], [1], [0, 0, 1, 1], [], []>} : vector<16x128xf32>, vector<128x128xf32>, vector<16x128xf32> -> vector<16x128xf32>
    %26 = vector.broadcast %24 : vector<1x128xf32> to vector<16x128xf32>
    %27 = arith.addf %25, %26 : vector<16x128xf32>
    %c0_17 = arith.constant 0 : index
    %c0_18 = arith.constant 0 : index
    %28 = vector.load %arg8[%c0_17, %c0_18] : memref<16x128xf32, #tpu.memory_space<vmem>>, vector<16x128xf32>
    tpu.vector_store %arg8[%c0_17, %c0_18], %27 {strides = array<i32>} : memref<16x128xf32, #tpu.memory_space<vmem>>, vector<16x128xf32>,
    return
  }
  func.func @transform_0(%arg0: i32) -> (i32, i32) {
    %c0_i32 = arith.constant 0 : i32
    %c0_i32_0 = arith.constant 0 : i32
    return %arg0, %c0_i32 : i32, i32
  }
  func.func @transform_1(%arg0: i32) -> (i32, i32) {
    %c0_i32 = arith.constant 0 : i32
    %c0_i32_0 = arith.constant 0 : i32
    %c0_i32_1 = arith.constant 0 : i32
    return %c0_i32, %c0_i32_0 : i32, i32
  }
  func.func @transform_2(%arg0: i32) -> (i32, i32) {
    %c0_i32 = arith.constant 0 : i32
    %c0_i32_0 = arith.constant 0 : i32
    %c0_i32_1 = arith.constant 0 : i32
    return %c0_i32, %c0_i32_0 : i32, i32
  }
  func.func @transform_3(%arg0: i32) -> (i32, i32) {
    %c0_i32 = arith.constant 0 : i32
    %c0_i32_0 = arith.constant 0 : i32
    %c0_i32_1 = arith.constant 0 : i32
    return %c0_i32, %c0_i32_0 : i32, i32
  }
  func.func @transform_4(%arg0: i32) -> (i32, i32) {
    %c0_i32 = arith.constant 0 : i32
    %c0_i32_0 = arith.constant 0 : i32
    %c0_i32_1 = arith.constant 0 : i32
    return %c0_i32, %c0_i32_0 : i32, i32
  }
  func.func @transform_5(%arg0: i32) -> (i32, i32) {
    %c0_i32 = arith.constant 0 : i32
    %c0_i32_0 = arith.constant 0 : i32
    %c0_i32_1 = arith.constant 0 : i32
    return %c0_i32, %c0_i32_0 : i32, i32
  }
  func.func @transform_6(%arg0: i32) -> (i32, i32) {
    %c0_i32 = arith.constant 0 : i32
    %c0_i32_0 = arith.constant 0 : i32
    %c0_i32_1 = arith.constant 0 : i32
    return %c0_i32, %c0_i32_0 : i32, i32
  }
  func.func @transform_7(%arg0: i32) -> (i32, i32) {
    %c0_i32 = arith.constant 0 : i32
    %c0_i32_0 = arith.constant 0 : i32
    return %arg0, %c0_i32 : i32, i32
  }
}

</mosaic_0001>

<llo_original>
// kernel: _forward_impl.1
$region0: #{_forward_impl.1}
  #allocation0 [shape = 'u32[]', space=smem, size = 0x4, offset = 0x4, fixed_abs, tag = 'smem constant byte address 0x4 - core index']
  #allocation1 [shape = 'u32[72,128]{1,0:T(1,128)}', space=vmem, size = 0x9000, scoped, tag = 'internal scratch']
  %s0 = inlined_call_operand.vmem [shape: f32[16,128], index: 0, kind: input, shape index: {}]
  %s1 = inlined_call_operand.vmem [shape: f32[128,128], index: 1, kind: input, shape index: {}]
  %s2 = inlined_call_operand.vmem [shape: f32[1,128], index: 2, kind: input, shape index: {}]
  %s3 = inlined_call_operand.vmem [shape: f32[128,128], index: 3, kind: input, shape index: {}]
  %s4 = inlined_call_operand.vmem [shape: f32[1,128], index: 4, kind: input, shape index: {}]
  %s5 = inlined_call_operand.vmem [shape: f32[128,128], index: 5, kind: input, shape index: {}]
  %s6 = inlined_call_operand.vmem [shape: f32[1,128], index: 6, kind: input, shape index: {}]
  %s7 = inlined_call_operand.hbm [shape: f32[16,128], index: 7, kind: output, shape index: {}]
  %s8 = sld [smem:[#allocation0]]
  $region38: #{_forward_impl.1} parent=0
    _
  %s10 = ssub.s32 1, %s8
  %s11 = scalar_select 0, %s10, %s8
  $region1: #{_forward_impl.1} parent=0
    #allocation2 [shape = 'u8[8192]{0}', space=vmem, size = 0x2000, scoped, tag = 'output window, operand 0, single buffered']
    #allocation3 [shape = 's32[1]{0}', space=sflag, size = 0x4, scoped, tag = 'scoped memory for _forward_impl.1']
    %12 = vsyncpa [#allocation3], 0
    // Predicated region
    $region2: #{_forward_impl.1} parent=1 // pred_check
      _
    $region3: #{_forward_impl.1} parent=1 // pred_check_branch
      %14 = sbr.rel (0) target = $region5
    $region4: #{_forward_impl.1} parent=1 // pred_region
      _
    $region5: #{_forward_impl.1} parent=1 // pred_fallthru
      _
    // Predicated region
    $region6: #{_forward_impl.1} parent=1 // pred_check
      _
    $region7: #{_forward_impl.1} parent=1 // pred_check_branch
      %16 = sbr.rel (0) target = $region9
    $region8: #{_forward_impl.1} parent=1 // pred_region
      _
    $region9: #{_forward_impl.1} parent=1 // pred_fallthru
      _
    // Predicated region
    $region10: #{_forward_impl.1} parent=1 // pred_check
      _
    $region11: #{_forward_impl.1} parent=1 // pred_check_branch
      %18 = sbr.rel (0) target = $region13
    $region12: #{_forward_impl.1} parent=1 // pred_region
      _
    $region13: #{_forward_impl.1} parent=1 // pred_fallthru
      _
    // Predicated region
    $region14: #{_forward_impl.1} parent=1 // pred_check
      _
    $region15: #{_forward_impl.1} parent=1 // pred_check_branch
      %20 = sbr.rel (0) target = $region17
    $region16: #{_forward_impl.1} parent=1 // pred_region
      _
    $region17: #{_forward_impl.1} parent=1 // pred_fallthru
      _
    // Predicated region
    $region18: #{_forward_impl.1} parent=1 // pred_check
      _
    $region19: #{_forward_impl.1} parent=1 // pred_check_branch
      %22 = sbr.rel (0) target = $region21
    $region20: #{_forward_impl.1} parent=1 // pred_region
      _
    $region21: #{_forward_impl.1} parent=1 // pred_fallthru
      _
    // Predicated region
    $region22: #{_forward_impl.1} parent=1 // pred_check
      _
    $region23: #{_forward_impl.1} parent=1 // pred_check_branch
      %24 = sbr.rel (0) target = $region25
    $region24: #{_forward_impl.1} parent=1 // pred_region
      _
    $region25: #{_forward_impl.1} parent=1 // pred_fallthru
      _
    // Predicated region
    $region26: #{_forward_impl.1} parent=1 // pred_check
      _
    $region27: #{_forward_impl.1} parent=1 // pred_check_branch
      %26 = sbr.rel (0) target = $region29
    $region28: #{_forward_impl.1} parent=1 // pred_region
      _
    $region29: #{_forward_impl.1} parent=1 // pred_fallthru
      _
    %v27 = vld [vmem:[%s0] sm:$0xff]
    %v28 = vld [vmem:[%s0 + $0x8] sm:$0xff]
    %v29 = vld [vmem:[%s1] sm:$0xff]
    %v30 = vld [vmem:[%s1 + $0x8] sm:$0xff]
    %v31 = vld [vmem:[%s1 + $0x10] sm:$0xff]
    %v32 = vld [vmem:[%s1 + $0x18] sm:$0xff]
    %v33 = vld [vmem:[%s1 + $0x20] sm:$0xff]
    %v34 = vld [vmem:[%s1 + $0x28] sm:$0xff]
    %v35 = vld [vmem:[%s1 + $0x30] sm:$0xff]
    %v36 = vld [vmem:[%s1 + $0x38] sm:$0xff]
    %v37 = vld [vmem:[%s1 + $0x40] sm:$0xff]
    %v38 = vld [vmem:[%s1 + $0x48] sm:$0xff]
    %v39 = vld [vmem:[%s1 + $0x50] sm:$0xff]
    %v40 = vld [vmem:[%s1 + $0x58] sm:$0xff]
    %v41 = vld [vmem:[%s1 + $0x60] sm:$0xff]
    %v42 = vld [vmem:[%s1 + $0x68] sm:$0xff]
    %v43 = vld [vmem:[%s1 + $0x70] sm:$0xff]
    %v44 = vld [vmem:[%s1 + $0x78] sm:$0xff]
    %v45 = vld [vmem:[%s2] sm:$0x1]
    %v47 = vperm.slane %v45, 0
    %49 = vmatpush.msra.mxu0 %v44
    %50 = vmatpush.msra.mxu0 %v43
    %51 = vmatpush.msra.mxu0 %v42
    %52 = vmatpush.msra.mxu0 %v41
    %53 = vmatpush.msra.mxu0 %v40
    %54 = vmatpush.msra.mxu0 %v39
    %55 = vmatpush.msra.mxu0 %v38
    %56 = vmatpush.msra.mxu0 %v37
    %57 = vmatpush.msra.mxu0 %v36
    %58 = vmatpush.msra.mxu0 %v35
    %59 = vmatpush.msra.mxu0 %v34
    %60 = vmatpush.msra.mxu0 %v33
    %61 = vmatpush.msra.mxu0 %v32
    %62 = vmatpush.msra.mxu0 %v31
    %63 = vmatpush.msra.mxu0 %v30
    %64 = vmatpush.msra.mxu0 %v29
    %65 = vmatmul.f32.gmra.mxu0 %v27
    %v66 = vpop.f32.mrf.mxu0
    %v67 = vadd.f32 %v47, %v66
    %68 = vmatmul.f32.gmra.mxu0 %v28
    %v69 = vpop.f32.mrf.mxu0
    %v70 = vadd.f32 %v47, %v69
    %71 = vdwg.mxu0
    %v72 = vxor.u32 %v67, 2147483648
    %v73 = vxor.u32 %v70, 2147483648
    %v74 = vmul.f32 %v72, 1.442695
    %v75 = vpow.pop %v74
    %v76 = vmul.f32 %v73, 1.442695
    %v77 = vpow.pop %v76
    %v78 = vadd.f32 %v75, 1.0
    %v79 = vadd.f32 %v77, 1.0
    %v80 = vrcp.pop %v78
    %v81 = vmul.f32 %v78, %v80
    %v82 = vsub.f32 1.0, %v81
    %v83 = vmul.f32 %v80, %v82
    %v84 = vadd.f32 %v80, %v83
    %vm85 = vweird.f32 %v78
    %vm86 = vweird.f32 %v80
    %vm87 = vmor %vm85, %vm86
    %v88 = vsel %vm87, %v80, %v84
    %v89 = vand.u32 2147483647, %v78
    %vm90 = vcmp.eq.f32.partialorder %v89, 8.507059e+37
    %v91 = vand.u32 %v78, 2147483648
    %v92 = vor.u32 1.1754944e-38, %v91
    %v93 = vsel %vm90, %v92, %v88
    %v94 = vmul.f32 1.0, %v93
    %v95 = vrcp.pop %v79
    %v96 = vmul.f32 %v79, %v95
    %v97 = vsub.f32 1.0, %v96
    %v98 = vmul.f32 %v95, %v97
    %v99 = vadd.f32 %v95, %v98
    %vm100 = vweird.f32 %v79
    %vm101 = vweird.f32 %v95
    %vm102 = vmor %vm100, %vm101
    %v103 = vsel %vm102, %v95, %v99
    %v104 = vand.u32 2147483647, %v79
    %vm105 = vcmp.eq.f32.partialorder %v104, 8.507059e+37
    %v106 = vand.u32 %v79, 2147483648
    %v107 = vor.u32 1.1754944e-38, %v106
    %v108 = vsel %vm105, %v107, %v103
    %v109 = vmul.f32 1.0, %v108
    %v110 = vmul.f32 %v67, %v94
    %v111 = vmul.f32 %v70, %v109
    %v112 = vld [vmem:[%s3] sm:$0xff]
    %v113 = vld [vmem:[%s3 + $0x8] sm:$0xff]
    %v114 = vld [vmem:[%s3 + $0x10] sm:$0xff]
    %v115 = vld [vmem:[%s3 + $0x18] sm:$0xff]
    %v116 = vld [vmem:[%s3 + $0x20] sm:$0xff]
    %v117 = vld [vmem:[%s3 + $0x28] sm:$0xff]
    %v118 = vld [vmem:[%s3 + $0x30] sm:$0xff]
    %v119 = vld [vmem:[%s3 + $0x38] sm:$0xff]
    %v120 = vld [vmem:[%s3 + $0x40] sm:$0xff]
    %v121 = vld [vmem:[%s3 + $0x48] sm:$0xff]
    %v122 = vld [vmem:[%s3 + $0x50] sm:$0xff]
    %v123 = vld [vmem:[%s3 + $0x58] sm:$0xff]
    %v124 = vld [vmem:[%s3 + $0x60] sm:$0xff]
    %v125 = vld [vmem:[%s3 + $0x68] sm:$0xff]
    %v126 = vld [vmem:[%s3 + $0x70] sm:$0xff]
    %v127 = vld [vmem:[%s3 + $0x78] sm:$0xff]
    %v128 = vld [vmem:[%s4] sm:$0x1]
    %v130 = vperm.slane %v128, 0
    %132 = vmatpush.msra.mxu0 %v127
    %133 = vmatpush.msra.mxu0 %v126
    %134 = vmatpush.msra.mxu0 %v125
    %135 = vmatpush.msra.mxu0 %v124
    %136 = vmatpush.msra.mxu0 %v123
    %137 = vmatpush.msra.mxu0 %v122
    %138 = vmatpush.msra.mxu0 %v121
    %139 = vmatpush.msra.mxu0 %v120
    %140 = vmatpush.msra.mxu0 %v119
    %141 = vmatpush.msra.mxu0 %v118
    %142 = vmatpush.msra.mxu0 %v117
    %143 = vmatpush.msra.mxu0 %v116
    %144 = vmatpush.msra.mxu0 %v115
    %145 = vmatpush.msra.mxu0 %v114
    %146 = vmatpush.msra.mxu0 %v113
    %147 = vmatpush.msra.mxu0 %v112
    %148 = vmatmul.f32.gmra.mxu0 %v110
    %v149 = vpop.f32.mrf.mxu0
    %v150 = vadd.f32 %v130, %v149
    %151 = vmatmul.f32.gmra.mxu0 %v111
    %v152 = vpop.f32.mrf.mxu0
    %v153 = vadd.f32 %v130, %v152
    %154 = vdwg.mxu0
    %v155 = vxor.u32 %v150, 2147483648
    %v156 = vxor.u32 %v153, 2147483648
    %v157 = vmul.f32 %v155, 1.442695
    %v158 = vpow.pop %v157
    %v159 = vmul.f32 %v156, 1.442695
    %v160 = vpow.pop %v159
    %v161 = vadd.f32 %v158, 1.0
    %v162 = vadd.f32 %v160, 1.0
    %v163 = vrcp.pop %v161
    %v164 = vmul.f32 %v161, %v163
    %v165 = vsub.f32 1.0, %v164
    %v166 = vmul.f32 %v163, %v165
    %v167 = vadd.f32 %v163, %v166
    %vm168 = vweird.f32 %v161
    %vm169 = vweird.f32 %v163
    %vm170 = vmor %vm168, %vm169
    %v171 = vsel %vm170, %v163, %v167
    %v172 = vand.u32 2147483647, %v161
    %vm173 = vcmp.eq.f32.partialorder %v172, 8.507059e+37
    %v174 = vand.u32 %v161, 2147483648
    %v175 = vor.u32 1.1754944e-38, %v174
    %v176 = vsel %vm173, %v175, %v171
    %v177 = vmul.f32 1.0, %v176
    %v178 = vrcp.pop %v162
    %v179 = vmul.f32 %v162, %v178
    %v180 = vsub.f32 1.0, %v179
    %v181 = vmul.f32 %v178, %v180
    %v182 = vadd.f32 %v178, %v181
    %vm183 = vweird.f32 %v162
    %vm184 = vweird.f32 %v178
    %vm185 = vmor %vm183, %vm184
    %v186 = vsel %vm185, %v178, %v182
    %v187 = vand.u32 2147483647, %v162
    %vm188 = vcmp.eq.f32.partialorder %v187, 8.507059e+37
    %v189 = vand.u32 %v162, 2147483648
    %v190 = vor.u32 1.1754944e-38, %v189
    %v191 = vsel %vm188, %v190, %v186
    %v192 = vmul.f32 1.0, %v191
    %v193 = vmul.f32 %v150, %v177
    %v194 = vmul.f32 %v153, %v192
    %v195 = vld [vmem:[%s5] sm:$0xff]
    %v196 = vld [vmem:[%s5 + $0x8] sm:$0xff]
    %v197 = vld [vmem:[%s5 + $0x10] sm:$0xff]
    %v198 = vld [vmem:[%s5 + $0x18] sm:$0xff]
    %v199 = vld [vmem:[%s5 + $0x20] sm:$0xff]
    %v200 = vld [vmem:[%s5 + $0x28] sm:$0xff]
    %v201 = vld [vmem:[%s5 + $0x30] sm:$0xff]
    %v202 = vld [vmem:[%s5 + $0x38] sm:$0xff]
    %v203 = vld [vmem:[%s5 + $0x40] sm:$0xff]
    %v204 = vld [vmem:[%s5 + $0x48] sm:$0xff]
    %v205 = vld [vmem:[%s5 + $0x50] sm:$0xff]
    %v206 = vld [vmem:[%s5 + $0x58] sm:$0xff]
    %v207 = vld [vmem:[%s5 + $0x60] sm:$0xff]
    %v208 = vld [vmem:[%s5 + $0x68] sm:$0xff]
    %v209 = vld [vmem:[%s5 + $0x70] sm:$0xff]
    %v210 = vld [vmem:[%s5 + $0x78] sm:$0xff]
    %v211 = vld [vmem:[%s6] sm:$0x1]
    %v213 = vperm.slane %v211, 0
    %215 = vmatpush.msra.mxu0 %v210
    %216 = vmatpush.msra.mxu0 %v209
    %217 = vmatpush.msra.mxu0 %v208
    %218 = vmatpush.msra.mxu0 %v207
    %219 = vmatpush.msra.mxu0 %v206
    %220 = vmatpush.msra.mxu0 %v205
    %221 = vmatpush.msra.mxu0 %v204
    %222 = vmatpush.msra.mxu0 %v203
    %223 = vmatpush.msra.mxu0 %v202
    %224 = vmatpush.msra.mxu0 %v201
    %225 = vmatpush.msra.mxu0 %v200
    %226 = vmatpush.msra.mxu0 %v199
    %227 = vmatpush.msra.mxu0 %v198
    %228 = vmatpush.msra.mxu0 %v197
    %229 = vmatpush.msra.mxu0 %v196
    %230 = vmatpush.msra.mxu0 %v195
    %231 = vmatmul.f32.gmra.mxu0 %v193
    %v232 = vpop.f32.mrf.mxu0
    %v233 = vadd.f32 %v213, %v232
    %234 = vmatmul.f32.gmra.mxu0 %v194
    %v235 = vpop.f32.mrf.mxu0
    %v236 = vadd.f32 %v213, %v235
    %237 = vdwg.mxu0
    %238 = vst [vmem:[#allocation2] sm:$0xff] %v233
    %239 = vst [vmem:[#allocation2 + $0x8] sm:$0xff] %v236
    // Predicated region
    $region30: #{_forward_impl.1} parent=1 // pred_check
      _
    $region31: #{_forward_impl.1} parent=1 // pred_check_branch
      %241 = sbr.rel (0) target = $region33
    $region32: #{_forward_impl.1} parent=1 // pred_region
      %243 = vsyncadd [#allocation3], 0
      %s244 = sshll.u32 [#allocation2], 4
      %s245 = int_to_ptr.vmem [resolvable:$true] %s244
      %s246 = sshll.u32 %s7, 4
      %s247 = int_to_ptr.hbm [resolvable:$true] %s246
      %252 = dma.vmem_to_hbm [thread:$0]  %s245, 256, %s247, [#allocation3], 128, 128, 8
    $region33: #{_forward_impl.1} parent=1 // pred_fallthru
      _
    // Predicated region
    $region34: #{_forward_impl.1} parent=1 // pred_check
      _
    $region35: #{_forward_impl.1} parent=1 // pred_check_branch
      %254 = sbr.rel (0) target = $region37
    $region36: #{_forward_impl.1} parent=1 // pred_region
      %256 = dma.done [#allocation3], 256
    $region37: #{_forward_impl.1} parent=1 // pred_fallthru
      _
    %257 = vsyncpa [#allocation3], 1

// kernel: _forward_impl.1
$region0: #{_forward_impl.1}
  #allocation0 [shape = 'u32[]', space=smem, size = 0x4, offset = 0x4, fixed_abs, tag = 'smem constant byte address 0x4 - core index']
  #allocation1 [shape = 'u32[72,128]{1,0:T(1,128)}', space=vmem, size = 0x9000, scoped, tag = 'internal scratch']
  %s0 = inlined_call_operand.vmem [shape: f32[16,128], index: 0, kind: input, shape index: {}]
  %s1 = inlined_call_operand.vmem [shape: f32[128,128], index: 1, kind: input, shape index: {}]
  %s2 = inlined_call_operand.vmem [shape: f32[1,128], index: 2, kind: input, shape index: {}]
  %s3 = inlined_call_operand.vmem [shape: f32[128,128], index: 3, kind: input, shape index: {}]
  %s4 = inlined_call_operand.vmem [shape: f32[1,128], index: 4, kind: input, shape index: {}]
  %s5 = inlined_call_operand.vmem [shape: f32[128,128], index: 5, kind: input, shape index: {}]
  %s6 = inlined_call_operand.vmem [shape: f32[1,128], index: 6, kind: input, shape index: {}]
  %s7 = inlined_call_operand.hbm [shape: f32[16,128], index: 7, kind: output, shape index: {}]
  %s8 = sld [smem:[#allocation0]]
  $region38: #{_forward_impl.1} parent=0
    _
  %s10 = ssub.s32 1, %s8
  %s11 = scalar_select 0, %s10, %s8
  $region1: #{_forward_impl.1} parent=0
    #allocation2 [shape = 'u8[8192]{0}', space=vmem, size = 0x2000, scoped, tag = 'output window, operand 0, single buffered']
    #allocation3 [shape = 's32[1]{0}', space=sflag, size = 0x4, scoped, tag = 'scoped memory for _forward_impl.1']
    %12 = vsyncpa [#allocation3], 0
    // Predicated region
    $region2: #{_forward_impl.1} parent=1 // pred_check
      _
    $region3: #{_forward_impl.1} parent=1 // pred_check_branch
      %14 = sbr.rel (0) target = $region5
    $region4: #{_forward_impl.1} parent=1 // pred_region
      _
    $region5: #{_forward_impl.1} parent=1 // pred_fallthru
      _
    // Predicated region
    $region6: #{_forward_impl.1} parent=1 // pred_check
      _
    $region7: #{_forward_impl.1} parent=1 // pred_check_branch
      %16 = sbr.rel (0) target = $region9
    $region8: #{_forward_impl.1} parent=1 // pred_region
      _
    $region9: #{_forward_impl.1} parent=1 // pred_fallthru
      _
    // Predicated region
    $region10: #{_forward_impl.1} parent=1 // pred_check
      _
    $region11: #{_forward_impl.1} parent=1 // pred_check_branch
      %18 = sbr.rel (0) target = $region13
    $region12: #{_forward_impl.1} parent=1 // pred_region
      _
    $region13: #{_forward_impl.1} parent=1 // pred_fallthru
      _
    // Predicated region
    $region14: #{_forward_impl.1} parent=1 // pred_check
      _
    $region15: #{_forward_impl.1} parent=1 // pred_check_branch
      %20 = sbr.rel (0) target = $region17
    $region16: #{_forward_impl.1} parent=1 // pred_region
      _
    $region17: #{_forward_impl.1} parent=1 // pred_fallthru
      _
    // Predicated region
    $region18: #{_forward_impl.1} parent=1 // pred_check
      _
    $region19: #{_forward_impl.1} parent=1 // pred_check_branch
      %22 = sbr.rel (0) target = $region21
    $region20: #{_forward_impl.1} parent=1 // pred_region
      _
    $region21: #{_forward_impl.1} parent=1 // pred_fallthru
      _
    // Predicated region
    $region22: #{_forward_impl.1} parent=1 // pred_check
      _
    $region23: #{_forward_impl.1} parent=1 // pred_check_branch
      %24 = sbr.rel (0) target = $region25
    $region24: #{_forward_impl.1} parent=1 // pred_region
      _
    $region25: #{_forward_impl.1} parent=1 // pred_fallthru
      _
    // Predicated region
    $region26: #{_forward_impl.1} parent=1 // pred_check
      _
    $region27: #{_forward_impl.1} parent=1 // pred_check_branch
      %26 = sbr.rel (0) target = $region29
    $region28: #{_forward_impl.1} parent=1 // pred_region
      _
    $region29: #{_forward_impl.1} parent=1 // pred_fallthru
      _
    %v27 = vld [vmem:[%s0] sm:$0xff]
    %v28 = vld [vmem:[%s0 + $0x8] sm:$0xff]
    %v29 = vld [vmem:[%s1] sm:$0xff]
    %v30 = vld [vmem:[%s1 + $0x8] sm:$0xff]
    %v31 = vld [vmem:[%s1 + $0x10] sm:$0xff]
    %v32 = vld [vmem:[%s1 + $0x18] sm:$0xff]
    %v33 = vld [vmem:[%s1 + $0x20] sm:$0xff]
    %v34 = vld [vmem:[%s1 + $0x28] sm:$0xff]
    %v35 = vld [vmem:[%s1 + $0x30] sm:$0xff]
    %v36 = vld [vmem:[%s1 + $0x38] sm:$0xff]
    %v37 = vld [vmem:[%s1 + $0x40] sm:$0xff]
    %v38 = vld [vmem:[%s1 + $0x48] sm:$0xff]
    %v39 = vld [vmem:[%s1 + $0x50] sm:$0xff]
    %v40 = vld [vmem:[%s1 + $0x58] sm:$0xff]
    %v41 = vld [vmem:[%s1 + $0x60] sm:$0xff]
    %v42 = vld [vmem:[%s1 + $0x68] sm:$0xff]
    %v43 = vld [vmem:[%s1 + $0x70] sm:$0xff]
    %v44 = vld [vmem:[%s1 + $0x78] sm:$0xff]
    %v45 = vld [vmem:[%s2] sm:$0x1]
    %v47 = vperm.slane %v45, 0
    %49 = vmatpush.msra.mxu0 %v44
    %50 = vmatpush.msra.mxu0 %v43
    %51 = vmatpush.msra.mxu0 %v42
    %52 = vmatpush.msra.mxu0 %v41
    %53 = vmatpush.msra.mxu0 %v40
    %54 = vmatpush.msra.mxu0 %v39
    %55 = vmatpush.msra.mxu0 %v38
    %56 = vmatpush.msra.mxu0 %v37
    %57 = vmatpush.msra.mxu0 %v36
    %58 = vmatpush.msra.mxu0 %v35
    %59 = vmatpush.msra.mxu0 %v34
    %60 = vmatpush.msra.mxu0 %v33
    %61 = vmatpush.msra.mxu0 %v32
    %62 = vmatpush.msra.mxu0 %v31
    %63 = vmatpush.msra.mxu0 %v30
    %64 = vmatpush.msra.mxu0 %v29
    %65 = vmatmul.f32.gmra.mxu0 %v27
    %v66 = vpop.f32.mrf.mxu0
    %v67 = vadd.f32 %v47, %v66
    %68 = vmatmul.f32.gmra.mxu0 %v28
    %v69 = vpop.f32.mrf.mxu0
    %v70 = vadd.f32 %v47, %v69
    %71 = vdwg.mxu0
    %v72 = vxor.u32 %v67, 2147483648
    %v73 = vxor.u32 %v70, 2147483648
    %v74 = vmul.f32 %v72, 1.442695
    %v75 = vpow.pop %v74
    %v76 = vmul.f32 %v73, 1.442695
    %v77 = vpow.pop %v76
    %v78 = vadd.f32 %v75, 1.0
    %v79 = vadd.f32 %v77, 1.0
    %v80 = vrcp.pop %v78
    %v81 = vmul.f32 %v78, %v80
    %v82 = vsub.f32 1.0, %v81
    %v83 = vmul.f32 %v80, %v82
    %v84 = vadd.f32 %v80, %v83
    %vm85 = vweird.f32 %v78
    %vm86 = vweird.f32 %v80
    %vm87 = vmor %vm85, %vm86
    %v88 = vsel %vm87, %v80, %v84
    %v89 = vand.u32 2147483647, %v78
    %vm90 = vcmp.eq.f32.partialorder %v89, 8.507059e+37
    %v91 = vand.u32 %v78, 2147483648
    %v92 = vor.u32 1.1754944e-38, %v91
    %v93 = vsel %vm90, %v92, %v88
    %v94 = vmul.f32 1.0, %v93
    %v95 = vrcp.pop %v79
    %v96 = vmul.f32 %v79, %v95
    %v97 = vsub.f32 1.0, %v96
    %v98 = vmul.f32 %v95, %v97
    %v99 = vadd.f32 %v95, %v98
    %vm100 = vweird.f32 %v79
    %vm101 = vweird.f32 %v95
    %vm102 = vmor %vm100, %vm101
    %v103 = vsel %vm102, %v95, %v99
    %v104 = vand.u32 2147483647, %v79
    %vm105 = vcmp.eq.f32.partialorder %v104, 8.507059e+37
    %v106 = vand.u32 %v79, 2147483648
    %v107 = vor.u32 1.1754944e-38, %v106
    %v108 = vsel %vm105, %v107, %v103
    %v109 = vmul.f32 1.0, %v108
    %v110 = vmul.f32 %v67, %v94
    %v111 = vmul.f32 %v70, %v109
    %v112 = vld [vmem:[%s3] sm:$0xff]
    %v113 = vld [vmem:[%s3 + $0x8] sm:$0xff]
    %v114 = vld [vmem:[%s3 + $0x10] sm:$0xff]
    %v115 = vld [vmem:[%s3 + $0x18] sm:$0xff]
    %v116 = vld [vmem:[%s3 + $0x20] sm:$0xff]
    %v117 = vld [vmem:[%s3 + $0x28] sm:$0xff]
    %v118 = vld [vmem:[%s3 + $0x30] sm:$0xff]
    %v119 = vld [vmem:[%s3 + $0x38] sm:$0xff]
    %v120 = vld [vmem:[%s3 + $0x40] sm:$0xff]
    %v121 = vld [vmem:[%s3 + $0x48] sm:$0xff]
    %v122 = vld [vmem:[%s3 + $0x50] sm:$0xff]
    %v123 = vld [vmem:[%s3 + $0x58] sm:$0xff]
    %v124 = vld [vmem:[%s3 + $0x60] sm:$0xff]
    %v125 = vld [vmem:[%s3 + $0x68] sm:$0xff]
    %v126 = vld [vmem:[%s3 + $0x70] sm:$0xff]
    %v127 = vld [vmem:[%s3 + $0x78] sm:$0xff]
    %v128 = vld [vmem:[%s4] sm:$0x1]
    %v130 = vperm.slane %v128, 0
    %132 = vmatpush.msra.mxu0 %v127
    %133 = vmatpush.msra.mxu0 %v126
    %134 = vmatpush.msra.mxu0 %v125
    %135 = vmatpush.msra.mxu0 %v124
    %136 = vmatpush.msra.mxu0 %v123
    %137 = vmatpush.msra.mxu0 %v122
    %138 = vmatpush.msra.mxu0 %v121
    %139 = vmatpush.msra.mxu0 %v120
    %140 = vmatpush.msra.mxu0 %v119
    %141 = vmatpush.msra.mxu0 %v118
    %142 = vmatpush.msra.mxu0 %v117
    %143 = vmatpush.msra.mxu0 %v116
    %144 = vmatpush.msra.mxu0 %v115
    %145 = vmatpush.msra.mxu0 %v114
    %146 = vmatpush.msra.mxu0 %v113
    %147 = vmatpush.msra.mxu0 %v112
    %148 = vmatmul.f32.gmra.mxu0 %v110
    %v149 = vpop.f32.mrf.mxu0
    %v150 = vadd.f32 %v130, %v149
    %151 = vmatmul.f32.gmra.mxu0 %v111
    %v152 = vpop.f32.mrf.mxu0
    %v153 = vadd.f32 %v130, %v152
    %154 = vdwg.mxu0
    %v155 = vxor.u32 %v150, 2147483648
    %v156 = vxor.u32 %v153, 2147483648
    %v157 = vmul.f32 %v155, 1.442695
    %v158 = vpow.pop %v157
    %v159 = vmul.f32 %v156, 1.442695
    %v160 = vpow.pop %v159
    %v161 = vadd.f32 %v158, 1.0
    %v162 = vadd.f32 %v160, 1.0
    %v163 = vrcp.pop %v161
    %v164 = vmul.f32 %v161, %v163
    %v165 = vsub.f32 1.0, %v164
    %v166 = vmul.f32 %v163, %v165
    %v167 = vadd.f32 %v163, %v166
    %vm168 = vweird.f32 %v161
    %vm169 = vweird.f32 %v163
    %vm170 = vmor %vm168, %vm169
    %v171 = vsel %vm170, %v163, %v167
    %v172 = vand.u32 2147483647, %v161
    %vm173 = vcmp.eq.f32.partialorder %v172, 8.507059e+37
    %v174 = vand.u32 %v161, 2147483648
    %v175 = vor.u32 1.1754944e-38, %v174
    %v176 = vsel %vm173, %v175, %v171
    %v177 = vmul.f32 1.0, %v176
    %v178 = vrcp.pop %v162
    %v179 = vmul.f32 %v162, %v178
    %v180 = vsub.f32 1.0, %v179
    %v181 = vmul.f32 %v178, %v180
    %v182 = vadd.f32 %v178, %v181
    %vm183 = vweird.f32 %v162
    %vm184 = vweird.f32 %v178
    %vm185 = vmor %vm183, %vm184
    %v186 = vsel %vm185, %v178, %v182
    %v187 = vand.u32 2147483647, %v162
    %vm188 = vcmp.eq.f32.partialorder %v187, 8.507059e+37
    %v189 = vand.u32 %v162, 2147483648
    %v190 = vor.u32 1.1754944e-38, %v189
    %v191 = vsel %vm188, %v190, %v186
    %v192 = vmul.f32 1.0, %v191
    %v193 = vmul.f32 %v150, %v177
    %v194 = vmul.f32 %v153, %v192
    %v195 = vld [vmem:[%s5] sm:$0xff]
    %v196 = vld [vmem:[%s5 + $0x8] sm:$0xff]
    %v197 = vld [vmem:[%s5 + $0x10] sm:$0xff]
    %v198 = vld [vmem:[%s5 + $0x18] sm:$0xff]
    %v199 = vld [vmem:[%s5 + $0x20] sm:$0xff]
    %v200 = vld [vmem:[%s5 + $0x28] sm:$0xff]
    %v201 = vld [vmem:[%s5 + $0x30] sm:$0xff]
    %v202 = vld [vmem:[%s5 + $0x38] sm:$0xff]
    %v203 = vld [vmem:[%s5 + $0x40] sm:$0xff]
    %v204 = vld [vmem:[%s5 + $0x48] sm:$0xff]
    %v205 = vld [vmem:[%s5 + $0x50] sm:$0xff]
    %v206 = vld [vmem:[%s5 + $0x58] sm:$0xff]
    %v207 = vld [vmem:[%s5 + $0x60] sm:$0xff]
    %v208 = vld [vmem:[%s5 + $0x68] sm:$0xff]
    %v209 = vld [vmem:[%s5 + $0x70] sm:$0xff]
    %v210 = vld [vmem:[%s5 + $0x78] sm:$0xff]
    %v211 = vld [vmem:[%s6] sm:$0x1]
    %v213 = vperm.slane %v211, 0
    %215 = vmatpush.msra.mxu0 %v210
    %216 = vmatpush.msra.mxu0 %v209
    %217 = vmatpush.msra.mxu0 %v208
    %218 = vmatpush.msra.mxu0 %v207
    %219 = vmatpush.msra.mxu0 %v206
    %220 = vmatpush.msra.mxu0 %v205
    %221 = vmatpush.msra.mxu0 %v204
    %222 = vmatpush.msra.mxu0 %v203
    %223 = vmatpush.msra.mxu0 %v202
    %224 = vmatpush.msra.mxu0 %v201
    %225 = vmatpush.msra.mxu0 %v200
    %226 = vmatpush.msra.mxu0 %v199
    %227 = vmatpush.msra.mxu0 %v198
    %228 = vmatpush.msra.mxu0 %v197
    %229 = vmatpush.msra.mxu0 %v196
    %230 = vmatpush.msra.mxu0 %v195
    %231 = vmatmul.f32.gmra.mxu0 %v193
    %v232 = vpop.f32.mrf.mxu0
    %v233 = vadd.f32 %v213, %v232
    %234 = vmatmul.f32.gmra.mxu0 %v194
    %v235 = vpop.f32.mrf.mxu0
    %v236 = vadd.f32 %v213, %v235
    %237 = vdwg.mxu0
    %238 = vst [vmem:[#allocation2] sm:$0xff] %v233
    %239 = vst [vmem:[#allocation2 + $0x8] sm:$0xff] %v236
    // Predicated region
    $region30: #{_forward_impl.1} parent=1 // pred_check
      _
    $region31: #{_forward_impl.1} parent=1 // pred_check_branch
      %241 = sbr.rel (0) target = $region33
    $region32: #{_forward_impl.1} parent=1 // pred_region
      %243 = vsyncadd [#allocation3], 0
      %s244 = sshll.u32 [#allocation2], 4
      %s245 = int_to_ptr.vmem [resolvable:$true] %s244
      %s246 = sshll.u32 %s7, 4
      %s247 = int_to_ptr.hbm [resolvable:$true] %s246
      %252 = dma.vmem_to_hbm [thread:$0]  %s245, 256, %s247, [#allocation3], 128, 128, 8
    $region33: #{_forward_impl.1} parent=1 // pred_fallthru
      _
    // Predicated region
    $region34: #{_forward_impl.1} parent=1 // pred_check
      _
    $region35: #{_forward_impl.1} parent=1 // pred_check_branch
      %254 = sbr.rel (0) target = $region37
    $region36: #{_forward_impl.1} parent=1 // pred_region
      %256 = dma.done [#allocation3], 256
    $region37: #{_forward_impl.1} parent=1 // pred_fallthru
      _
    %257 = vsyncpa [#allocation3], 1

</llo_original>
